<compile_context>
chip_gen: v7x
topology: tpu7x:2x2x1
jax: 0.10.0
libtpu: 0.0.40
codegen_flags: <defaults>
</compile_context>

<pallas_src>
import functools

import jax
import jax.numpy as jnp
from jax.experimental import pallas as pl
from jax.experimental.pallas import tpu as pltpu


def _round_up(x, m):
    return (x + m - 1) // m * m


def _outconv_kernel(x0_ref, x1_ref, x2_ref, w_ref, b_ref, o_ref, xcol_ref, *,
                    cin, wp, p_in, p_out):
    # x{0,1,2}_ref: (1, 1, Cin, P_in)   -- padded input planes d, d+1, d+2
    # w_ref: (Cout, 27*Cin)   b_ref: (Cout, 1)   o_ref: (1, 1, Cout, P_out)
    # xcol_ref: VMEM scratch (27*Cin, P_out)
    planes = (x0_ref, x1_ref, x2_ref)
    for kd in range(3):
        plane = planes[kd][0, 0]                      # (Cin, P_in) value
        for kh in range(3):
            for kw in range(3):
                off = kh * wp + kw                    # static tap offset (lanes)
                if off == 0:
                    slab = plane[:, :p_out]
                else:
                    # Lane rotation on the XLU; the kept region never wraps
                    # because off + p_out <= p_in by construction.
                    slab = pltpu.roll(plane, shift=p_in - off, axis=1)[:, :p_out]
                k = kd * 9 + kh * 3 + kw
                xcol_ref[k * cin:(k + 1) * cin, :] = slab
    # One fused matmul over K = 27*Cin; accumulation happens inside the MXU.
    y = jnp.dot(w_ref[...], xcol_ref[...], preferred_element_type=jnp.float32)
    y = jnp.tanh(y + b_ref[...])                      # (Cout, 1) broadcasts over lanes
    o_ref[0, 0] = y.astype(o_ref.dtype)


def outconv_forward(x_ncdhw, weight, bias, *, compute_dtype=None):
    """Conv3d(in_ch, out_ch, 3, stride=1, padding=1) + Tanh; NCDHW in / NCDHW out."""
    N, Cin, D, H, W = x_ncdhw.shape
    Cout = weight.shape[0]
    Wp = W + 2
    Dp = D + 2

    # Output plane length (lanes): multiple of 128 covering every valid (h, w).
    p_out = _round_up((H - 1) * Wp + W, 128)
    # Input plane length: output plane + headroom for the largest in-plane tap.
    headroom = _round_up(2 * Wp + 2, 128)
    p_in = p_out + headroom                           # always >= (H + 2) * Wp

    # --- wrapper glue (plain JAX): channels next to the plane, zero-pad,
    #     flatten (H+2, W+2) into one lane axis, add tail headroom. ---
    x = jnp.transpose(x_ncdhw, (0, 2, 1, 3, 4))                   # (N, D, Cin, H, W)
    xp = jnp.pad(x, ((0, 0), (1, 1), (0, 0), (1, 1), (1, 1)))     # (N, Dp, Cin, H+2, Wp)
    x_flat = xp.reshape(N, Dp, Cin, (H + 2) * Wp)
    x_flat = jnp.pad(x_flat, ((0, 0), (0, 0), (0, 0), (0, p_in - (H + 2) * Wp)))
    if compute_dtype is not None:
        x_flat = x_flat.astype(compute_dtype)

    # weight (Cout, Cin, 3, 3, 3) -> (Cout, 27*Cin); column k*Cin+ci matches
    # xcol row k*Cin+ci with tap index k = kd*9 + kh*3 + kw.
    w2 = jnp.transpose(weight, (0, 2, 3, 4, 1)).reshape(Cout, 27 * Cin)
    if compute_dtype is not None:
        w2 = w2.astype(compute_dtype)
    b2 = bias.reshape(Cout, 1).astype(jnp.float32)

    kernel = functools.partial(_outconv_kernel, cin=Cin, wp=Wp,
                               p_in=p_in, p_out=p_out)

    out = pl.pallas_call(
        kernel,
        out_shape=jax.ShapeDtypeStruct((N, D, Cout, p_out), x_ncdhw.dtype),
        grid_spec=pltpu.PrefetchScalarGridSpec(
            num_scalar_prefetch=0,
            grid=(N, D),
            in_specs=[
                # same array passed 3x with depth-shifted index maps (kd = 0, 1, 2)
                pl.BlockSpec((1, 1, Cin, p_in), lambda n, d: (n, d, 0, 0)),
                pl.BlockSpec((1, 1, Cin, p_in), lambda n, d: (n, d + 1, 0, 0)),
                pl.BlockSpec((1, 1, Cin, p_in), lambda n, d: (n, d + 2, 0, 0)),
                pl.BlockSpec((Cout, 27 * Cin), lambda n, d: (0, 0)),   # VMEM-resident
                pl.BlockSpec((Cout, 1), lambda n, d: (0, 0)),          # VMEM-resident
            ],
            out_specs=pl.BlockSpec((1, 1, Cout, p_out), lambda n, d: (n, d, 0, 0)),
            scratch_shapes=[pltpu.VMEM((27 * Cin, p_out), x_flat.dtype)],
        ),
        compiler_params=pltpu.CompilerParams(
            dimension_semantics=("parallel", "parallel"),
            vmem_limit_bytes=32 * 1024 * 1024,
        ),
    )(x_flat, x_flat, x_flat, w2, b2)

    # (N, D, Cout, p_out): keep valid plane rows/cols, back to NCDHW.
    out = out[..., :H * Wp].reshape(N, D, Cout, H, Wp)[..., :W]
    return jnp.transpose(out, (0, 2, 1, 3, 4))


def outconv_reference(x, weight, bias):
    y = jax.lax.conv_general_dilated(
        x, weight, window_strides=(1, 1, 1),
        padding=((1, 1), (1, 1), (1, 1)),
        dimension_numbers=("NCDHW", "OIDHW", "NCDHW"))
    return jnp.tanh(y + bias[None, :, None, None, None])


if __name__ == "__main__":
    key = jax.random.PRNGKey(0)
    kx, kw, kb = jax.random.split(key, 3)

    N, in_ch, out_ch = 2, 8, 8
    D = H = W = 8

    # deterministic PyTorch-style init: U(-1/sqrt(fan_in), 1/sqrt(fan_in))
    fan_in = in_ch * 3 * 3 * 3
    bound = 1.0 / jnp.sqrt(jnp.float32(fan_in))
    x = jax.random.normal(kx, (N, in_ch, D, H, W), dtype=jnp.float32)
    weight = jax.random.uniform(kw, (out_ch, in_ch, 3, 3, 3),
                                minval=-bound, maxval=bound, dtype=jnp.float32)
    bias = jax.random.uniform(kb, (out_ch,),
                              minval=-bound, maxval=bound, dtype=jnp.float32)

    out = jax.block_until_ready(outconv_forward(x, weight, bias))
    ref = jax.block_until_ready(outconv_reference(x, weight, bias))

    assert out.shape == (N, out_ch, D, H, W), out.shape
    assert jnp.allclose(out, ref, atol=2e-4, rtol=2e-4), \
        float(jnp.max(jnp.abs(out - ref)))
    print("KERNEL_OK")
</pallas_src>

<mosaic_0001>
module attributes {stable_mosaic.version = 11 : i64} {
  func.func @_outconv_kernel(%arg0: i32, %arg1: i32, %arg2: memref<1x1x8x256xf32, #tpu.memory_space<vmem>>, %arg3: memref<1x1x8x256xf32, #tpu.memory_space<vmem>>, %arg4: memref<1x1x8x256xf32, #tpu.memory_space<vmem>>, %arg5: memref<8x216xf32, #tpu.memory_space<vmem>>, %arg6: memref<8x1xf32, #tpu.memory_space<vmem>>, %arg7: memref<1x1x8x128xf32, #tpu.memory_space<vmem>>, %arg8: memref<216x128xf32, #tpu.memory_space<vmem>>) attributes {dimension_semantics = [#tpu.dimension_semantics<parallel>, #tpu.dimension_semantics<parallel>], iteration_bounds = array<i64: 2, 8>, scalar_prefetch = 0 : i64, scratch_operands = 1 : i64, tpu.core_type = #tpu.core_type<tc>, window_params = [{transform_indices = @transform_0, window_bounds = array<i64: 1, 1, 8, 256>}, {transform_indices = @transform_1, window_bounds = array<i64: 1, 1, 8, 256>}, {transform_indices = @transform_2, window_bounds = array<i64: 1, 1, 8, 256>}, {pipeline_mode = #tpu.pipeline_mode<synchronous>, transform_indices = @transform_3, window_bounds = array<i64: 8, 216>}, {pipeline_mode = #tpu.pipeline_mode<synchronous>, transform_indices = @transform_4, window_bounds = array<i64: 8, 1>}, {transform_indices = @transform_5, window_bounds = array<i64: 1, 1, 8, 128>}]} {
    %c0 = arith.constant 0 : index
    %c0_0 = arith.constant 0 : index
    %c0_1 = arith.constant 0 : index
    %c0_2 = arith.constant 0 : index
    %0 = vector.load %arg2[%c0, %c0_0, %c0_1, %c0_2] : memref<1x1x8x256xf32, #tpu.memory_space<vmem>>, vector<1x1x8x256xf32>
    %1 = vector.shape_cast %0 : vector<1x1x8x256xf32> to vector<8x256xf32>
    %2 = vector.extract_strided_slice %1 {offsets = [0, 0], sizes = [8, 128], strides = [1, 1]} : vector<8x256xf32> to vector<8x128xf32>
    %c0_3 = arith.constant 0 : index
    %c0_4 = arith.constant 0 : index
    %3 = vector.load %arg8[%c0_3, %c0_4] : memref<216x128xf32, #tpu.memory_space<vmem>>, vector<8x128xf32>
    tpu.vector_store %arg8[%c0_3, %c0_4], %2 {strides = array<i32>} : memref<216x128xf32, #tpu.memory_space<vmem>>, vector<8x128xf32>,
    %c255_i32 = arith.constant 255 : i32
    %4 = tpu.dynamic_rotate %1 by %c255_i32 dim 1 : vector<8x256xf32>, i32 -> vector<8x256xf32>
    %5 = vector.extract_strided_slice %4 {offsets = [0, 0], sizes = [8, 128], strides = [1, 1]} : vector<8x256xf32> to vector<8x128xf32>
    %c8 = arith.constant 8 : index
    %c0_5 = arith.constant 0 : index
    %6 = vector.load %arg8[%c8, %c0_5] : memref<216x128xf32, #tpu.memory_space<vmem>>, vector<8x128xf32>
    tpu.vector_store %arg8[%c8, %c0_5], %5 {strides = array<i32>} : memref<216x128xf32, #tpu.memory_space<vmem>>, vector<8x128xf32>,
    %c254_i32 = arith.constant 254 : i32
    %7 = tpu.dynamic_rotate %1 by %c254_i32 dim 1 : vector<8x256xf32>, i32 -> vector<8x256xf32>
    %8 = vector.extract_strided_slice %7 {offsets = [0, 0], sizes = [8, 128], strides = [1, 1]} : vector<8x256xf32> to vector<8x128xf32>
    %c16 = arith.constant 16 : index
    %c0_6 = arith.constant 0 : index
    %9 = vector.load %arg8[%c16, %c0_6] : memref<216x128xf32, #tpu.memory_space<vmem>>, vector<8x128xf32>
    tpu.vector_store %arg8[%c16, %c0_6], %8 {strides = array<i32>} : memref<216x128xf32, #tpu.memory_space<vmem>>, vector<8x128xf32>,
    %c246_i32 = arith.constant 246 : i32
    %10 = tpu.dynamic_rotate %1 by %c246_i32 dim 1 : vector<8x256xf32>, i32 -> vector<8x256xf32>
    %11 = vector.extract_strided_slice %10 {offsets = [0, 0], sizes = [8, 128], strides = [1, 1]} : vector<8x256xf32> to vector<8x128xf32>
    %c24 = arith.constant 24 : index
    %c0_7 = arith.constant 0 : index
    %12 = vector.load %arg8[%c24, %c0_7] : memref<216x128xf32, #tpu.memory_space<vmem>>, vector<8x128xf32>
    tpu.vector_store %arg8[%c24, %c0_7], %11 {strides = array<i32>} : memref<216x128xf32, #tpu.memory_space<vmem>>, vector<8x128xf32>,
    %c245_i32 = arith.constant 245 : i32
    %13 = tpu.dynamic_rotate %1 by %c245_i32 dim 1 : vector<8x256xf32>, i32 -> vector<8x256xf32>
    %14 = vector.extract_strided_slice %13 {offsets = [0, 0], sizes = [8, 128], strides = [1, 1]} : vector<8x256xf32> to vector<8x128xf32>
    %c32 = arith.constant 32 : index
    %c0_8 = arith.constant 0 : index
    %15 = vector.load %arg8[%c32, %c0_8] : memref<216x128xf32, #tpu.memory_space<vmem>>, vector<8x128xf32>
    tpu.vector_store %arg8[%c32, %c0_8], %14 {strides = array<i32>} : memref<216x128xf32, #tpu.memory_space<vmem>>, vector<8x128xf32>,
    %c244_i32 = arith.constant 244 : i32
    %16 = tpu.dynamic_rotate %1 by %c244_i32 dim 1 : vector<8x256xf32>, i32 -> vector<8x256xf32>
    %17 = vector.extract_strided_slice %16 {offsets = [0, 0], sizes = [8, 128], strides = [1, 1]} : vector<8x256xf32> to vector<8x128xf32>
    %c40 = arith.constant 40 : index
    %c0_9 = arith.constant 0 : index
    %18 = vector.load %arg8[%c40, %c0_9] : memref<216x128xf32, #tpu.memory_space<vmem>>, vector<8x128xf32>
    tpu.vector_store %arg8[%c40, %c0_9], %17 {strides = array<i32>} : memref<216x128xf32, #tpu.memory_space<vmem>>, vector<8x128xf32>,
    %c236_i32 = arith.constant 236 : i32
    %19 = tpu.dynamic_rotate %1 by %c236_i32 dim 1 : vector<8x256xf32>, i32 -> vector<8x256xf32>
    %20 = vector.extract_strided_slice %19 {offsets = [0, 0], sizes = [8, 128], strides = [1, 1]} : vector<8x256xf32> to vector<8x128xf32>
    %c48 = arith.constant 48 : index
    %c0_10 = arith.constant 0 : index
    %21 = vector.load %arg8[%c48, %c0_10] : memref<216x128xf32, #tpu.memory_space<vmem>>, vector<8x128xf32>
    tpu.vector_store %arg8[%c48, %c0_10], %20 {strides = array<i32>} : memref<216x128xf32, #tpu.memory_space<vmem>>, vector<8x128xf32>,
    %c235_i32 = arith.constant 235 : i32
    %22 = tpu.dynamic_rotate %1 by %c235_i32 dim 1 : vector<8x256xf32>, i32 -> vector<8x256xf32>
    %23 = vector.extract_strided_slice %22 {offsets = [0, 0], sizes = [8, 128], strides = [1, 1]} : vector<8x256xf32> to vector<8x128xf32>
    %c56 = arith.constant 56 : index
    %c0_11 = arith.constant 0 : index
    %24 = vector.load %arg8[%c56, %c0_11] : memref<216x128xf32, #tpu.memory_space<vmem>>, vector<8x128xf32>
    tpu.vector_store %arg8[%c56, %c0_11], %23 {strides = array<i32>} : memref<216x128xf32, #tpu.memory_space<vmem>>, vector<8x128xf32>,
    %c234_i32 = arith.constant 234 : i32
    %25 = tpu.dynamic_rotate %1 by %c234_i32 dim 1 : vector<8x256xf32>, i32 -> vector<8x256xf32>
    %26 = vector.extract_strided_slice %25 {offsets = [0, 0], sizes = [8, 128], strides = [1, 1]} : vector<8x256xf32> to vector<8x128xf32>
    %c64 = arith.constant 64 : index
    %c0_12 = arith.constant 0 : index
    %27 = vector.load %arg8[%c64, %c0_12] : memref<216x128xf32, #tpu.memory_space<vmem>>, vector<8x128xf32>
    tpu.vector_store %arg8[%c64, %c0_12], %26 {strides = array<i32>} : memref<216x128xf32, #tpu.memory_space<vmem>>, vector<8x128xf32>,
    %c0_13 = arith.constant 0 : index
    %c0_14 = arith.constant 0 : index
    %c0_15 = arith.constant 0 : index
    %c0_16 = arith.constant 0 : index
    %28 = vector.load %arg3[%c0_13, %c0_14, %c0_15, %c0_16] : memref<1x1x8x256xf32, #tpu.memory_space<vmem>>, vector<1x1x8x256xf32>
    %29 = vector.shape_cast %28 : vector<1x1x8x256xf32> to vector<8x256xf32>
    %30 = vector.extract_strided_slice %29 {offsets = [0, 0], sizes = [8, 128], strides = [1, 1]} : vector<8x256xf32> to vector<8x128xf32>
    %c72 = arith.constant 72 : index
    %c0_17 = arith.constant 0 : index
    %31 = vector.load %arg8[%c72, %c0_17] : memref<216x128xf32, #tpu.memory_space<vmem>>, vector<8x128xf32>
    tpu.vector_store %arg8[%c72, %c0_17], %30 {strides = array<i32>} : memref<216x128xf32, #tpu.memory_space<vmem>>, vector<8x128xf32>,
    %c255_i32_18 = arith.constant 255 : i32
    %32 = tpu.dynamic_rotate %29 by %c255_i32_18 dim 1 : vector<8x256xf32>, i32 -> vector<8x256xf32>
    %33 = vector.extract_strided_slice %32 {offsets = [0, 0], sizes = [8, 128], strides = [1, 1]} : vector<8x256xf32> to vector<8x128xf32>
    %c80 = arith.constant 80 : index
    %c0_19 = arith.constant 0 : index
    %34 = vector.load %arg8[%c80, %c0_19] : memref<216x128xf32, #tpu.memory_space<vmem>>, vector<8x128xf32>
    tpu.vector_store %arg8[%c80, %c0_19], %33 {strides = array<i32>} : memref<216x128xf32, #tpu.memory_space<vmem>>, vector<8x128xf32>,
    %c254_i32_20 = arith.constant 254 : i32
    %35 = tpu.dynamic_rotate %29 by %c254_i32_20 dim 1 : vector<8x256xf32>, i32 -> vector<8x256xf32>
    %36 = vector.extract_strided_slice %35 {offsets = [0, 0], sizes = [8, 128], strides = [1, 1]} : vector<8x256xf32> to vector<8x128xf32>
    %c88 = arith.constant 88 : index
    %c0_21 = arith.constant 0 : index
    %37 = vector.load %arg8[%c88, %c0_21] : memref<216x128xf32, #tpu.memory_space<vmem>>, vector<8x128xf32>
    tpu.vector_store %arg8[%c88, %c0_21], %36 {strides = array<i32>} : memref<216x128xf32, #tpu.memory_space<vmem>>, vector<8x128xf32>,
    %c246_i32_22 = arith.constant 246 : i32
    %38 = tpu.dynamic_rotate %29 by %c246_i32_22 dim 1 : vector<8x256xf32>, i32 -> vector<8x256xf32>
    %39 = vector.extract_strided_slice %38 {offsets = [0, 0], sizes = [8, 128], strides = [1, 1]} : vector<8x256xf32> to vector<8x128xf32>
    %c96 = arith.constant 96 : index
    %c0_23 = arith.constant 0 : index
    %40 = vector.load %arg8[%c96, %c0_23] : memref<216x128xf32, #tpu.memory_space<vmem>>, vector<8x128xf32>
    tpu.vector_store %arg8[%c96, %c0_23], %39 {strides = array<i32>} : memref<216x128xf32, #tpu.memory_space<vmem>>, vector<8x128xf32>,
    %c245_i32_24 = arith.constant 245 : i32
    %41 = tpu.dynamic_rotate %29 by %c245_i32_24 dim 1 : vector<8x256xf32>, i32 -> vector<8x256xf32>
    %42 = vector.extract_strided_slice %41 {offsets = [0, 0], sizes = [8, 128], strides = [1, 1]} : vector<8x256xf32> to vector<8x128xf32>
    %c104 = arith.constant 104 : index
    %c0_25 = arith.constant 0 : index
    %43 = vector.load %arg8[%c104, %c0_25] : memref<216x128xf32, #tpu.memory_space<vmem>>, vector<8x128xf32>
    tpu.vector_store %arg8[%c104, %c0_25], %42 {strides = array<i32>} : memref<216x128xf32, #tpu.memory_space<vmem>>, vector<8x128xf32>,
    %c244_i32_26 = arith.constant 244 : i32
    %44 = tpu.dynamic_rotate %29 by %c244_i32_26 dim 1 : vector<8x256xf32>, i32 -> vector<8x256xf32>
    %45 = vector.extract_strided_slice %44 {offsets = [0, 0], sizes = [8, 128], strides = [1, 1]} : vector<8x256xf32> to vector<8x128xf32>
    %c112 = arith.constant 112 : index
    %c0_27 = arith.constant 0 : index
    %46 = vector.load %arg8[%c112, %c0_27] : memref<216x128xf32, #tpu.memory_space<vmem>>, vector<8x128xf32>
    tpu.vector_store %arg8[%c112, %c0_27], %45 {strides = array<i32>} : memref<216x128xf32, #tpu.memory_space<vmem>>, vector<8x128xf32>,
    %c236_i32_28 = arith.constant 236 : i32
    %47 = tpu.dynamic_rotate %29 by %c236_i32_28 dim 1 : vector<8x256xf32>, i32 -> vector<8x256xf32>
    %48 = vector.extract_strided_slice %47 {offsets = [0, 0], sizes = [8, 128], strides = [1, 1]} : vector<8x256xf32> to vector<8x128xf32>
    %c120 = arith.constant 120 : index
    %c0_29 = arith.constant 0 : index
    %49 = vector.load %arg8[%c120, %c0_29] : memref<216x128xf32, #tpu.memory_space<vmem>>, vector<8x128xf32>
    tpu.vector_store %arg8[%c120, %c0_29], %48 {strides = array<i32>} : memref<216x128xf32, #tpu.memory_space<vmem>>, vector<8x128xf32>,
    %c235_i32_30 = arith.constant 235 : i32
    %50 = tpu.dynamic_rotate %29 by %c235_i32_30 dim 1 : vector<8x256xf32>, i32 -> vector<8x256xf32>
    %51 = vector.extract_strided_slice %50 {offsets = [0, 0], sizes = [8, 128], strides = [1, 1]} : vector<8x256xf32> to vector<8x128xf32>
    %c128 = arith.constant 128 : index
    %c0_31 = arith.constant 0 : index
    %52 = vector.load %arg8[%c128, %c0_31] : memref<216x128xf32, #tpu.memory_space<vmem>>, vector<8x128xf32>
    tpu.vector_store %arg8[%c128, %c0_31], %51 {strides = array<i32>} : memref<216x128xf32, #tpu.memory_space<vmem>>, vector<8x128xf32>,
    %c234_i32_32 = arith.constant 234 : i32
    %53 = tpu.dynamic_rotate %29 by %c234_i32_32 dim 1 : vector<8x256xf32>, i32 -> vector<8x256xf32>
    %54 = vector.extract_strided_slice %53 {offsets = [0, 0], sizes = [8, 128], strides = [1, 1]} : vector<8x256xf32> to vector<8x128xf32>
    %c136 = arith.constant 136 : index
    %c0_33 = arith.constant 0 : index
    %55 = vector.load %arg8[%c136, %c0_33] : memref<216x128xf32, #tpu.memory_space<vmem>>, vector<8x128xf32>
    tpu.vector_store %arg8[%c136, %c0_33], %54 {strides = array<i32>} : memref<216x128xf32, #tpu.memory_space<vmem>>, vector<8x128xf32>,
    %c0_34 = arith.constant 0 : index
    %c0_35 = arith.constant 0 : index
    %c0_36 = arith.constant 0 : index
    %c0_37 = arith.constant 0 : index
    %56 = vector.load %arg4[%c0_34, %c0_35, %c0_36, %c0_37] : memref<1x1x8x256xf32, #tpu.memory_space<vmem>>, vector<1x1x8x256xf32>
    %57 = vector.shape_cast %56 : vector<1x1x8x256xf32> to vector<8x256xf32>
    %58 = vector.extract_strided_slice %57 {offsets = [0, 0], sizes = [8, 128], strides = [1, 1]} : vector<8x256xf32> to vector<8x128xf32>
    %c144 = arith.constant 144 : index
    %c0_38 = arith.constant 0 : index
    %59 = vector.load %arg8[%c144, %c0_38] : memref<216x128xf32, #tpu.memory_space<vmem>>, vector<8x128xf32>
    tpu.vector_store %arg8[%c144, %c0_38], %58 {strides = array<i32>} : memref<216x128xf32, #tpu.memory_space<vmem>>, vector<8x128xf32>,
    %c255_i32_39 = arith.constant 255 : i32
    %60 = tpu.dynamic_rotate %57 by %c255_i32_39 dim 1 : vector<8x256xf32>, i32 -> vector<8x256xf32>
    %61 = vector.extract_strided_slice %60 {offsets = [0, 0], sizes = [8, 128], strides = [1, 1]} : vector<8x256xf32> to vector<8x128xf32>
    %c152 = arith.constant 152 : index
    %c0_40 = arith.constant 0 : index
    %62 = vector.load %arg8[%c152, %c0_40] : memref<216x128xf32, #tpu.memory_space<vmem>>, vector<8x128xf32>
    tpu.vector_store %arg8[%c152, %c0_40], %61 {strides = array<i32>} : memref<216x128xf32, #tpu.memory_space<vmem>>, vector<8x128xf32>,
    %c254_i32_41 = arith.constant 254 : i32
    %63 = tpu.dynamic_rotate %57 by %c254_i32_41 dim 1 : vector<8x256xf32>, i32 -> vector<8x256xf32>
    %64 = vector.extract_strided_slice %63 {offsets = [0, 0], sizes = [8, 128], strides = [1, 1]} : vector<8x256xf32> to vector<8x128xf32>
    %c160 = arith.constant 160 : index
    %c0_42 = arith.constant 0 : index
    %65 = vector.load %arg8[%c160, %c0_42] : memref<216x128xf32, #tpu.memory_space<vmem>>, vector<8x128xf32>
    tpu.vector_store %arg8[%c160, %c0_42], %64 {strides = array<i32>} : memref<216x128xf32, #tpu.memory_space<vmem>>, vector<8x128xf32>,
    %c246_i32_43 = arith.constant 246 : i32
    %66 = tpu.dynamic_rotate %57 by %c246_i32_43 dim 1 : vector<8x256xf32>, i32 -> vector<8x256xf32>
    %67 = vector.extract_strided_slice %66 {offsets = [0, 0], sizes = [8, 128], strides = [1, 1]} : vector<8x256xf32> to vector<8x128xf32>
    %c168 = arith.constant 168 : index
    %c0_44 = arith.constant 0 : index
    %68 = vector.load %arg8[%c168, %c0_44] : memref<216x128xf32, #tpu.memory_space<vmem>>, vector<8x128xf32>
    tpu.vector_store %arg8[%c168, %c0_44], %67 {strides = array<i32>} : memref<216x128xf32, #tpu.memory_space<vmem>>, vector<8x128xf32>,
    %c245_i32_45 = arith.constant 245 : i32
    %69 = tpu.dynamic_rotate %57 by %c245_i32_45 dim 1 : vector<8x256xf32>, i32 -> vector<8x256xf32>
    %70 = vector.extract_strided_slice %69 {offsets = [0, 0], sizes = [8, 128], strides = [1, 1]} : vector<8x256xf32> to vector<8x128xf32>
    %c176 = arith.constant 176 : index
    %c0_46 = arith.constant 0 : index
    %71 = vector.load %arg8[%c176, %c0_46] : memref<216x128xf32, #tpu.memory_space<vmem>>, vector<8x128xf32>
    tpu.vector_store %arg8[%c176, %c0_46], %70 {strides = array<i32>} : memref<216x128xf32, #tpu.memory_space<vmem>>, vector<8x128xf32>,
    %c244_i32_47 = arith.constant 244 : i32
    %72 = tpu.dynamic_rotate %57 by %c244_i32_47 dim 1 : vector<8x256xf32>, i32 -> vector<8x256xf32>
    %73 = vector.extract_strided_slice %72 {offsets = [0, 0], sizes = [8, 128], strides = [1, 1]} : vector<8x256xf32> to vector<8x128xf32>
    %c184 = arith.constant 184 : index
    %c0_48 = arith.constant 0 : index
    %74 = vector.load %arg8[%c184, %c0_48] : memref<216x128xf32, #tpu.memory_space<vmem>>, vector<8x128xf32>
    tpu.vector_store %arg8[%c184, %c0_48], %73 {strides = array<i32>} : memref<216x128xf32, #tpu.memory_space<vmem>>, vector<8x128xf32>,
    %c236_i32_49 = arith.constant 236 : i32
    %75 = tpu.dynamic_rotate %57 by %c236_i32_49 dim 1 : vector<8x256xf32>, i32 -> vector<8x256xf32>
    %76 = vector.extract_strided_slice %75 {offsets = [0, 0], sizes = [8, 128], strides = [1, 1]} : vector<8x256xf32> to vector<8x128xf32>
    %c192 = arith.constant 192 : index
    %c0_50 = arith.constant 0 : index
    %77 = vector.load %arg8[%c192, %c0_50] : memref<216x128xf32, #tpu.memory_space<vmem>>, vector<8x128xf32>
    tpu.vector_store %arg8[%c192, %c0_50], %76 {strides = array<i32>} : memref<216x128xf32, #tpu.memory_space<vmem>>, vector<8x128xf32>,
    %c235_i32_51 = arith.constant 235 : i32
    %78 = tpu.dynamic_rotate %57 by %c235_i32_51 dim 1 : vector<8x256xf32>, i32 -> vector<8x256xf32>
    %79 = vector.extract_strided_slice %78 {offsets = [0, 0], sizes = [8, 128], strides = [1, 1]} : vector<8x256xf32> to vector<8x128xf32>
    %c200 = arith.constant 200 : index
    %c0_52 = arith.constant 0 : index
    %80 = vector.load %arg8[%c200, %c0_52] : memref<216x128xf32, #tpu.memory_space<vmem>>, vector<8x128xf32>
    tpu.vector_store %arg8[%c200, %c0_52], %79 {strides = array<i32>} : memref<216x128xf32, #tpu.memory_space<vmem>>, vector<8x128xf32>,
    %c234_i32_53 = arith.constant 234 : i32
    %81 = tpu.dynamic_rotate %57 by %c234_i32_53 dim 1 : vector<8x256xf32>, i32 -> vector<8x256xf32>
    %82 = vector.extract_strided_slice %81 {offsets = [0, 0], sizes = [8, 128], strides = [1, 1]} : vector<8x256xf32> to vector<8x128xf32>
    %c208 = arith.constant 208 : index
    %c0_54 = arith.constant 0 : index
    %83 = vector.load %arg8[%c208, %c0_54] : memref<216x128xf32, #tpu.memory_space<vmem>>, vector<8x128xf32>
    tpu.vector_store %arg8[%c208, %c0_54], %82 {strides = array<i32>} : memref<216x128xf32, #tpu.memory_space<vmem>>, vector<8x128xf32>,
    %c0_55 = arith.constant 0 : index
    %c0_56 = arith.constant 0 : index
    %84 = vector.load %arg5[%c0_55, %c0_56] : memref<8x216xf32, #tpu.memory_space<vmem>>, vector<8x216xf32>
    %c0_57 = arith.constant 0 : index
    %c0_58 = arith.constant 0 : index
    %85 = vector.load %arg8[%c0_57, %c0_58] : memref<216x128xf32, #tpu.memory_space<vmem>>, vector<216x128xf32>
    %cst = arith.constant dense<0.000000e+00> : vector<8x128xf32>
    %86 = tpu.matmul %84, %85, %cst {dimension_numbers = #tpu.dot_dimension_numbers<[1], [0], [0], [1], [0, 0, 1, 1], [], []>} : vector<8x216xf32>, vector<216x128xf32>, vector<8x128xf32> -> vector<8x128xf32>
    %c0_59 = arith.constant 0 : index
    %c0_60 = arith.constant 0 : index
    %87 = vector.load %arg6[%c0_59, %c0_60] : memref<8x1xf32, #tpu.memory_space<vmem>>, vector<8x1xf32>
    %88 = vector.broadcast %87 : vector<8x1xf32> to vector<8x128xf32>
    %89 = arith.addf %86, %88 : vector<8x128xf32>
    %90 = math.tanh %89 : vector<8x128xf32>
    %c0_61 = arith.constant 0 : index
    %c0_62 = arith.constant 0 : index
    %c0_63 = arith.constant 0 : index
    %c0_64 = arith.constant 0 : index
    %91 = vector.load %arg7[%c0_61, %c0_62, %c0_63, %c0_64] : memref<1x1x8x128xf32, #tpu.memory_space<vmem>>, vector<1x1x8x128xf32>
    %92 = vector.shape_cast %91 : vector<1x1x8x128xf32> to vector<8x128xf32>
    %93 = vector.shape_cast %90 : vector<8x128xf32> to vector<1x1x8x128xf32>
    tpu.vector_store %arg7[%c0_61, %c0_62, %c0_63, %c0_64], %93 {strides = array<i32>} : memref<1x1x8x128xf32, #tpu.memory_space<vmem>>, vector<1x1x8x128xf32>,
    return
  }
  func.func @transform_0(%arg0: i32, %arg1: i32) -> (i32, i32, i32, i32) {
    %c0_i32 = arith.constant 0 : i32
    %c0_i32_0 = arith.constant 0 : i32
    %c0_i32_1 = arith.constant 0 : i32
    return %arg0, %arg1, %c0_i32, %c0_i32_0 : i32, i32, i32, i32
  }
  func.func @transform_1(%arg0: i32, %arg1: i32) -> (i32, i32, i32, i32) {
    %c1_i32 = arith.constant 1 : i32
    %0 = arith.addi %arg1, %c1_i32 : i32
    %c0_i32 = arith.constant 0 : i32
    %c0_i32_0 = arith.constant 0 : i32
    %c0_i32_1 = arith.constant 0 : i32
    return %arg0, %0, %c0_i32, %c0_i32_0 : i32, i32, i32, i32
  }
  func.func @transform_2(%arg0: i32, %arg1: i32) -> (i32, i32, i32, i32) {
    %c2_i32 = arith.constant 2 : i32
    %0 = arith.addi %arg1, %c2_i32 : i32
    %c0_i32 = arith.constant 0 : i32
    %c0_i32_0 = arith.constant 0 : i32
    %c0_i32_1 = arith.constant 0 : i32
    return %arg0, %0, %c0_i32, %c0_i32_0 : i32, i32, i32, i32
  }
  func.func @transform_3(%arg0: i32, %arg1: i32) -> (i32, i32) {
    %c0_i32 = arith.constant 0 : i32
    %c0_i32_0 = arith.constant 0 : i32
    %c0_i32_1 = arith.constant 0 : i32
    return %c0_i32, %c0_i32_0 : i32, i32
  }
  func.func @transform_4(%arg0: i32, %arg1: i32) -> (i32, i32) {
    %c0_i32 = arith.constant 0 : i32
    %c0_i32_0 = arith.constant 0 : i32
    %c0_i32_1 = arith.constant 0 : i32
    return %c0_i32, %c0_i32_0 : i32, i32
  }
  func.func @transform_5(%arg0: i32, %arg1: i32) -> (i32, i32, i32, i32) {
    %c0_i32 = arith.constant 0 : i32
    %c0_i32_0 = arith.constant 0 : i32
    %c0_i32_1 = arith.constant 0 : i32
    return %arg0, %arg1, %c0_i32, %c0_i32_0 : i32, i32, i32, i32
  }
}

</mosaic_0001>

<llo_original>
// kernel: tpu_custom_call.1
$region0: #{tpu_custom_call.1}
  #allocation0 [shape = 'u32[]', space=smem, size = 0x4, offset = 0x4, fixed_abs, tag = 'smem constant byte address 0x4 - core index']
  #allocation1 [shape = 'u32[144,128]{1,0:T(1,128)}', space=vmem, size = 0x12000, scoped, tag = 'internal scratch']
  #allocation2 [shape = 'f32[216,128]{1,0:T(8,128)}', space=vmem, size = 0x1b000, scoped, tag = 'scratch operand']
  %s0 = inlined_call_operand.hbm [shape: f32[2,10,8,256], index: 0, kind: input, shape index: {}]
  %s1 = inlined_call_operand.hbm [shape: f32[2,10,8,256], index: 1, kind: input, shape index: {}]
  %s2 = inlined_call_operand.hbm [shape: f32[2,10,8,256], index: 2, kind: input, shape index: {}]
  %s3 = inlined_call_operand.vmem [shape: f32[8,216], index: 3, kind: input, shape index: {}]
  %s4 = inlined_call_operand.vmem [shape: f32[8,1], index: 4, kind: input, shape index: {}]
  %s5 = inlined_call_operand.hbm [shape: f32[2,8,8,128], index: 5, kind: output, shape index: {}]
  %s6 = sld [smem:[#allocation0]]
  $region65: #{tpu_custom_call.1} parent=0
    _
  %s8 = ssub.s32 1, %s6
  %s9 = scalar_select 0, %s8, %s6
  $region1: #{tpu_custom_call.1} parent=0
    #allocation3 [shape = 'u8[16384]{0}', space=vmem, size = 0x4000, scoped, tag = 'input window, operand 0']
    #allocation4 [shape = 's32[2]{0}', space=sflag, size = 0x8, scoped, tag = 'scoped memory for tpu_custom_call.1']
    #allocation5 [shape = 's32[2]{0}', space=sflag, size = 0x8, scoped, tag = 'scoped memory for tpu_custom_call.1']
    #allocation6 [shape = 'u8[16384]{0}', space=vmem, size = 0x4000, scoped, tag = 'input window, operand 1']
    #allocation7 [shape = 's32[2]{0}', space=sflag, size = 0x8, scoped, tag = 'scoped memory for tpu_custom_call.1']
    #allocation8 [shape = 'u8[16384]{0}', space=vmem, size = 0x4000, scoped, tag = 'input window, operand 2']
    #allocation9 [shape = 'u8[8192]{0}', space=vmem, size = 0x2000, scoped, tag = 'output window, operand 0']
    %10 = vsyncpa [#allocation4], 0
    %s11 = scalar_lea.sflag [#allocation4], 1
    %12 = vsyncpa %s11, 0
    %13 = vsyncpa [#allocation7], 0
    %s14 = scalar_lea.sflag [#allocation7], 1
    %15 = vsyncpa %s14, 0
    %16 = vsyncpa [#allocation5], 0
    %s17 = scalar_lea.sflag [#allocation5], 1
    %18 = vsyncpa %s17, 0
    loop: start=0, step=1, limit=18
    $region2: #{tpu_custom_call.1} parent=1 // loop_pre_header
      _
    $region3: #{tpu_custom_call.1} parent=1 // loop_header
      %s20 = sphi 0, %s24
      %p21 = scmp.ge.s32.totalorder %s20, 18
      %s27 = sphi 0, %s39
      %s28 = sphi 0, %s35
      %s29 = sphi 0, %s27
      %s30 = sphi 0, %s28
      %s31 = sphi 0, %s29
      %s32 = sphi 0, %s30
      %s44 = sphi 0, %s46
      %s47 = sphi 0, %s44
      %s48 = sphi 0, %s47
      %s64 = sphi 0, %s48
      %s74 = sphi 0, %s76
      %s77 = sphi 0, %s74
      %s78 = sphi 0, %s77
      %s94 = sphi 0, %s78
      %s104 = sphi 0, %s106
      %s107 = sphi 0, %s104
      %s108 = sphi 0, %s107
      %s124 = sphi 0, %s108
      %s128 = sphi 0, %s128
      %s130 = sphi 0, %s128
      %s131 = sphi 0, %s130
      %s145 = sphi 0, %s131
      %s149 = sphi 0, %s149
      %s151 = sphi 0, %s149
      %s152 = sphi 0, %s151
      %s166 = sphi 0, %s152
      %s174 = sphi 0, %s176
      %s177 = sphi 0, %s174
      %s178 = sphi 0, %s177
      %s194 = sphi 0, %s178
    $region4: #{tpu_custom_call.1} parent=1 // loop_header_branch
      %23 = sbr.rel (%p21) target = $region8
    $region5: #{tpu_custom_call.1} parent=1 // loop_body
      %s25 = ssub.s32 %s20, 1
      %s26 = ssub.s32 %s20, 2
      %s33 = sadd.s32 1, %s28
      %p34 = scmp.ge.s32.totalorder %s33, 8
      %s35 = scalar_select %p34, 0, %s33
      %s36 = sadd.s32 1, %s27
      %s37 = scalar_select %p34, %s36, %s27
      %p38 = scmp.ge.s32.totalorder %s37, 2
      %s39 = scalar_select %p38, 0, %s37
      %s40 = ssub.s32 %s27, %s39
      %s41 = ssub.s32 %s28, %s35
      %s42 = sor.u32 %s40, %s41
      %p43 = scmp.eq.s32.totalorder %s42, 0
      %s45 = sadd.s32 %s44, 1
      %s46 = scalar_select %p43, %s44, %s45
      %p49 = pneg %p43
      %p50 = scmp.eq.s32.totalorder %s20, 15
      %p51 = por %p49, %p50
      %p52 = scmp.ne.s32.totalorder %s44, %s47
      %p53 = scmp.eq.s32.totalorder %s20, 0
      %p54 = por %p52, %p53
      %p55 = scmp.ne.s32.totalorder %s44, %s47
      %p56 = scmp.eq.s32.totalorder %s25, 15
      %p57 = por %p55, %p56
      %p58 = scmp.ne.s32.totalorder %s47, %s48
      %p59 = scmp.eq.s32.totalorder %s25, 0
      %p60 = por %p58, %p59
      %p61 = scmp.ne.s32.totalorder %s47, %s48
      %p62 = scmp.eq.s32.totalorder %s26, 15
      %p63 = por %p61, %p62
      %p65 = scmp.ne.s32.totalorder %s48, %s64
      %p66 = scmp.eq.s32.totalorder %s26, 0
      %p67 = por %p65, %p66
      %s68 = sadd.s32 %s28, 1
      %s69 = sadd.s32 %s35, 1
      %s70 = ssub.s32 %s27, %s39
      %s71 = ssub.s32 %s68, %s69
      %s72 = sor.u32 %s70, %s71
      %p73 = scmp.eq.s32.totalorder %s72, 0
      %s75 = sadd.s32 %s74, 1
      %s76 = scalar_select %p73, %s74, %s75
      %p79 = pneg %p73
      %p80 = scmp.eq.s32.totalorder %s20, 15
      %p81 = por %p79, %p80
      %p82 = scmp.ne.s32.totalorder %s74, %s77
      %p83 = scmp.eq.s32.totalorder %s20, 0
      %p84 = por %p82, %p83
      %p85 = scmp.ne.s32.totalorder %s74, %s77
      %p86 = scmp.eq.s32.totalorder %s25, 15
      %p87 = por %p85, %p86
      %p88 = scmp.ne.s32.totalorder %s77, %s78
      %p89 = scmp.eq.s32.totalorder %s25, 0
      %p90 = por %p88, %p89
      %p91 = scmp.ne.s32.totalorder %s77, %s78
      %p92 = scmp.eq.s32.totalorder %s26, 15
      %p93 = por %p91, %p92
      %p95 = scmp.ne.s32.totalorder %s78, %s94
      %p96 = scmp.eq.s32.totalorder %s26, 0
      %p97 = por %p95, %p96
      %s98 = sadd.s32 %s28, 2
      %s99 = sadd.s32 %s35, 2
      %s100 = ssub.s32 %s27, %s39
      %s101 = ssub.s32 %s98, %s99
      %s102 = sor.u32 %s100, %s101
      %p103 = scmp.eq.s32.totalorder %s102, 0
      %s105 = sadd.s32 %s104, 1
      %s106 = scalar_select %p103, %s104, %s105
      %p109 = pneg %p103
      %p110 = scmp.eq.s32.totalorder %s20, 15
      %p111 = por %p109, %p110
      %p112 = scmp.ne.s32.totalorder %s104, %s107
      %p113 = scmp.eq.s32.totalorder %s20, 0
      %p114 = por %p112, %p113
      %p115 = scmp.ne.s32.totalorder %s104, %s107
      %p116 = scmp.eq.s32.totalorder %s25, 15
      %p117 = por %p115, %p116
      %p118 = scmp.ne.s32.totalorder %s107, %s108
      %p119 = scmp.eq.s32.totalorder %s25, 0
      %p120 = por %p118, %p119
      %p121 = scmp.ne.s32.totalorder %s107, %s108
      %p122 = scmp.eq.s32.totalorder %s26, 15
      %p123 = por %p121, %p122
      %p125 = scmp.ne.s32.totalorder %s108, %s124
      %p126 = scmp.eq.s32.totalorder %s26, 0
      %p127 = por %p125, %p126
      %s129 = sadd.s32 %s128, 1
      %p132 = scmp.eq.s32.totalorder %s20, 15
      %p133 = scmp.ne.s32.totalorder %s128, %s130
      %p134 = scmp.eq.s32.totalorder %s20, 0
      %p135 = por %p133, %p134
      %p136 = scmp.ne.s32.totalorder %s128, %s130
      %p137 = scmp.eq.s32.totalorder %s25, 15
      %p138 = por %p136, %p137
      %p139 = scmp.ne.s32.totalorder %s130, %s131
      %p140 = scmp.eq.s32.totalorder %s25, 0
      %p141 = por %p139, %p140
      %p142 = scmp.ne.s32.totalorder %s130, %s131
      %p143 = scmp.eq.s32.totalorder %s26, 15
      %p144 = por %p142, %p143
      %p146 = scmp.ne.s32.totalorder %s131, %s145
      %p147 = scmp.eq.s32.totalorder %s26, 0
      %p148 = por %p146, %p147
      %s150 = sadd.s32 %s149, 1
      %p153 = scmp.eq.s32.totalorder %s20, 15
      %p154 = scmp.ne.s32.totalorder %s149, %s151
      %p155 = scmp.eq.s32.totalorder %s20, 0
      %p156 = por %p154, %p155
      %p157 = scmp.ne.s32.totalorder %s149, %s151
      %p158 = scmp.eq.s32.totalorder %s25, 15
      %p159 = por %p157, %p158
      %p160 = scmp.ne.s32.totalorder %s151, %s152
      %p161 = scmp.eq.s32.totalorder %s25, 0
      %p162 = por %p160, %p161
      %p163 = scmp.ne.s32.totalorder %s151, %s152
      %p164 = scmp.eq.s32.totalorder %s26, 15
      %p165 = por %p163, %p164
      %p167 = scmp.ne.s32.totalorder %s152, %s166
      %p168 = scmp.eq.s32.totalorder %s26, 0
      %p169 = por %p167, %p168
      %s170 = ssub.s32 %s27, %s39
      %s171 = ssub.s32 %s28, %s35
      %s172 = sor.u32 %s170, %s171
      %p173 = scmp.eq.s32.totalorder %s172, 0
      %s175 = sadd.s32 %s174, 1
      %s176 = scalar_select %p173, %s174, %s175
      %p179 = pneg %p173
      %p180 = scmp.eq.s32.totalorder %s20, 15
      %p181 = por %p179, %p180
      %p182 = scmp.ne.s32.totalorder %s174, %s177
      %p183 = scmp.eq.s32.totalorder %s20, 0
      %p184 = por %p182, %p183
      %p185 = scmp.ne.s32.totalorder %s174, %s177
      %p186 = scmp.eq.s32.totalorder %s25, 15
      %p187 = por %p185, %p186
      %p188 = scmp.ne.s32.totalorder %s177, %s178
      %p189 = scmp.eq.s32.totalorder %s25, 0
      %p190 = por %p188, %p189
      %p191 = scmp.ne.s32.totalorder %s177, %s178
      %p192 = scmp.eq.s32.totalorder %s26, 15
      %p193 = por %p191, %p192
      %p195 = scmp.ne.s32.totalorder %s178, %s194
      %p196 = scmp.eq.s32.totalorder %s26, 0
      %p197 = por %p195, %p196
      %p198 = scmp.le.s32.totalorder 1, %s20
      %p199 = scmp.lt.s32.totalorder %s20, 17
      %p200 = pnand %p198, %p199
      %p201 = pneg %p200
      // Predicated region
      $region9: #{tpu_custom_call.1} parent=5 // pred_check
        _
      $region10: #{tpu_custom_call.1} parent=5 // pred_check_branch
        %203 = sbr.rel (%p200) target = $region12
      $region11: #{tpu_custom_call.1} parent=5 // pred_region
        %s204 = ssub.s32 %s20, 1
        // Predicated region
        $region13: #{tpu_custom_call.1} parent=11 // pred_check
          %p205 = pneg %p141
        $region14: #{tpu_custom_call.1} parent=11 // pred_check_branch
          %207 = sbr.rel (%p205) target = $region16
        $region15: #{tpu_custom_call.1} parent=11 // pred_region
          _
        $region16: #{tpu_custom_call.1} parent=11 // pred_fallthru
          _
        // Predicated region
        $region17: #{tpu_custom_call.1} parent=11 // pred_check
          %p208 = pneg %p162
        $region18: #{tpu_custom_call.1} parent=11 // pred_check_branch
          %210 = sbr.rel (%p208) target = $region20
        $region19: #{tpu_custom_call.1} parent=11 // pred_region
          _
        $region20: #{tpu_custom_call.1} parent=11 // pred_fallthru
          _
      $region12: #{tpu_custom_call.1} parent=5 // pred_fallthru
        _
      %p211 = scmp.lt.s32.totalorder %s20, 16
      // Predicated region
      $region21: #{tpu_custom_call.1} parent=5 // pred_check
        %p212 = pneg %p211
      $region22: #{tpu_custom_call.1} parent=5 // pred_check_branch
        %214 = sbr.rel (%p212) target = $region24
      $region23: #{tpu_custom_call.1} parent=5 // pred_region
        // Predicated region
        $region25: #{tpu_custom_call.1} parent=23 // pred_check
          %p215 = pneg %p54
        $region26: #{tpu_custom_call.1} parent=23 // pred_check_branch
          %217 = sbr.rel (%p215) target = $region28
        $region27: #{tpu_custom_call.1} parent=23 // pred_region
          %s218 = sand.u32 %s44, 1
          %s219 = scalar_lea.sflag [#allocation4], %s218
          %s220 = sand.u32 %s44, 1
          %s221 = smul.addr %s220, 16
          %s222 = scalar_lea.vmem [#allocation3], %s221
          %s224 = ssub.s32 256, 256
          %225 = vsyncadd %s219, %s224
          %s226 = smul.addr %s28, 2
          %s227 = smul.addr %s27, 20
          %s228 = sadd.s32 %s226, %s227
          %s229 = smul.addr %s228, 128
          %s230 = scalar_lea.hbm %s0, %s229
          %s232 = sshll.u32 %s222, 4
          %s233 = int_to_ptr.vmem [resolvable:$true] %s232
          %235 = dma.hbm_to_vmem [thread:$0]  %s230, 256, %s233, %s219
        $region28: #{tpu_custom_call.1} parent=23 // pred_fallthru
          _
        // Predicated region
        $region29: #{tpu_custom_call.1} parent=23 // pred_check
          %p236 = pneg %p84
        $region30: #{tpu_custom_call.1} parent=23 // pred_check_branch
          %238 = sbr.rel (%p236) target = $region32
        $region31: #{tpu_custom_call.1} parent=23 // pred_region
          %s239 = sand.u32 %s20, 1
          %s240 = scalar_lea.sflag [#allocation7], %s239
          %s241 = sand.u32 %s74, 1
          %s242 = smul.addr %s241, 16
          %s243 = scalar_lea.vmem [#allocation6], %s242
          %s244 = sadd.s32 %s28, 1
          %s246 = ssub.s32 256, 256
          %247 = vsyncadd %s240, %s246
          %s248 = smul.addr %s244, 2
          %s249 = smul.addr %s27, 20
          %s250 = sadd.s32 %s248, %s249
          %s251 = smul.addr %s250, 128
          %s252 = scalar_lea.hbm %s1, %s251
          %s254 = sshll.u32 %s243, 4
          %s255 = int_to_ptr.vmem [resolvable:$true] %s254
          %257 = dma.hbm_to_vmem [thread:$0]  %s252, 256, %s255, %s240
        $region32: #{tpu_custom_call.1} parent=23 // pred_fallthru
          _
        // Predicated region
        $region33: #{tpu_custom_call.1} parent=23 // pred_check
          %p258 = pneg %p114
        $region34: #{tpu_custom_call.1} parent=23 // pred_check_branch
          %260 = sbr.rel (%p258) target = $region36
        $region35: #{tpu_custom_call.1} parent=23 // pred_region
          %s261 = sand.u32 %s20, 1
          %s262 = scalar_lea.sflag [#allocation7], %s261
          %s263 = sand.u32 %s104, 1
          %s264 = smul.addr %s263, 16
          %s265 = scalar_lea.vmem [#allocation8], %s264
          %s266 = sadd.s32 %s28, 2
          %s268 = ssub.s32 256, 256
          %269 = vsyncadd %s262, %s268
          %s270 = smul.addr %s266, 2
          %s271 = smul.addr %s27, 20
          %s272 = sadd.s32 %s270, %s271
          %s273 = smul.addr %s272, 128
          %s274 = scalar_lea.hbm %s2, %s273
          %s276 = sshll.u32 %s265, 4
          %s277 = int_to_ptr.vmem [resolvable:$true] %s276
          %279 = dma.hbm_to_vmem [thread:$0]  %s274, 256, %s277, %s262
        $region36: #{tpu_custom_call.1} parent=23 // pred_fallthru
          _
      $region24: #{tpu_custom_call.1} parent=5 // pred_fallthru
        _
      %p280 = scmp.le.s32.totalorder 1, %s20
      %p281 = scmp.lt.s32.totalorder %s20, 17
      %p282 = pnand %p280, %p281
      %p283 = pneg %p282
      // Predicated region
      $region37: #{tpu_custom_call.1} parent=5 // pred_check
        _
      $region38: #{tpu_custom_call.1} parent=5 // pred_check_branch
        %285 = sbr.rel (%p282) target = $region40
      $region39: #{tpu_custom_call.1} parent=5 // pred_region
        %s286 = ssub.s32 %s20, 1
        %s287 = sand.u32 %s47, 1
        %s288 = scalar_lea.sflag [#allocation4], %s287
        %s289 = sand.u32 %s47, 1
        %s290 = smul.addr %s289, 16
        %s291 = scalar_lea.vmem [#allocation3], %s290
        // Predicated region
        $region41: #{tpu_custom_call.1} parent=39 // pred_check
          %p292 = pneg %p60
        $region42: #{tpu_custom_call.1} parent=39 // pred_check_branch
          %294 = sbr.rel (%p292) target = $region44
        $region43: #{tpu_custom_call.1} parent=39 // pred_region
          %295 = dma.done %s288, 256
        $region44: #{tpu_custom_call.1} parent=39 // pred_fallthru
          _
        %s296 = sand.u32 %s25, 1
        %s297 = scalar_lea.sflag [#allocation7], %s296
        %s298 = sand.u32 %s77, 1
        %s299 = smul.addr %s298, 16
        %s300 = scalar_lea.vmem [#allocation6], %s299
        // Predicated region
        $region45: #{tpu_custom_call.1} parent=39 // pred_check
          %p301 = pneg %p90
        $region46: #{tpu_custom_call.1} parent=39 // pred_check_branch
          %303 = sbr.rel (%p301) target = $region48
        $region47: #{tpu_custom_call.1} parent=39 // pred_region
          %304 = dma.done %s297, 256
        $region48: #{tpu_custom_call.1} parent=39 // pred_fallthru
          _
        %s305 = sand.u32 %s25, 1
        %s306 = scalar_lea.sflag [#allocation7], %s305
        %s307 = sand.u32 %s107, 1
        %s308 = smul.addr %s307, 16
        %s309 = scalar_lea.vmem [#allocation8], %s308
        // Predicated region
        $region49: #{tpu_custom_call.1} parent=39 // pred_check
          %p310 = pneg %p120
        $region50: #{tpu_custom_call.1} parent=39 // pred_check_branch
          %312 = sbr.rel (%p310) target = $region52
        $region51: #{tpu_custom_call.1} parent=39 // pred_region
          %313 = dma.done %s306, 256
        $region52: #{tpu_custom_call.1} parent=39 // pred_fallthru
          _
        %s314 = sand.u32 %s47, 1
        %s315 = scalar_lea.sflag [#allocation4], %s314
        %s316 = sand.u32 %s47, 1
        %s317 = smul.addr %s316, 16
        %s318 = scalar_lea.vmem [#allocation3], %s317
        %p319 = pneg %p60
        %p320 = pneg %p57
        %s321 = sand.u32 %s25, 1
        %s322 = scalar_lea.sflag [#allocation7], %s321
        %s323 = sand.u32 %s77, 1
        %s324 = smul.addr %s323, 16
        %s325 = scalar_lea.vmem [#allocation6], %s324
        %p326 = pneg %p90
        %p327 = pneg %p87
        %s328 = sand.u32 %s25, 1
        %s329 = scalar_lea.sflag [#allocation7], %s328
        %s330 = sand.u32 %s107, 1
        %s331 = smul.addr %s330, 16
        %s332 = scalar_lea.vmem [#allocation8], %s331
        %p333 = pneg %p120
        %p334 = pneg %p117
        %p335 = pneg %p141
        %p336 = pneg %p138
        %p337 = pneg %p162
        %p338 = pneg %p159
        %p339 = pneg %p190
        %p340 = pneg %p187
        %s341 = sand.u32 %s177, 1
        %s342 = scalar_lea.sflag [#allocation5], %s341
        %s343 = sand.u32 %s177, 1
        %s344 = smul.addr %s343, 8
        %s345 = scalar_lea.vmem [#allocation9], %s344
        %s346 = sadd.s32 %s30, 1
        %s347 = sadd.s32 %s30, 2
        %v348 = vld [vmem:[%s291] sm:$0xff]
        %v349 = vld [vmem:[%s291 + $0x8] sm:$0xff]
        %350 = vst [vmem:[#allocation2] sm:$0xff] %v348
        %351 = vrot.lane.b32.xlu0 %v348, 127
        %v352 = vpop.permute.xlu0 %351
        %353 = vrot.lane.b32.xlu0 %v349, 127
        %v354 = vpop.permute.xlu0 %353
        %v355 = vlaneseq
        %v356 = vand.u32 %v355, 127
        %vm357 = vcmp.lt.s32.totalorder %v356, 127
        %v358 = vsel %vm357, %v352, %v354
        %359 = vst [vmem:[#allocation2 + $0x8] sm:$0xff] %v358
        %360 = vrot.lane.b32.xlu0 %v348, 126
        %v361 = vpop.permute.xlu0 %360
        %362 = vrot.lane.b32.xlu0 %v349, 126
        %v363 = vpop.permute.xlu0 %362
        %vm364 = vcmp.lt.s32.totalorder %v356, 126
        %v365 = vsel %vm364, %v361, %v363
        %366 = vst [vmem:[#allocation2 + $0x10] sm:$0xff] %v365
        %367 = vrot.lane.b32.xlu0 %v348, 118
        %v368 = vpop.permute.xlu0 %367
        %369 = vrot.lane.b32.xlu0 %v349, 118
        %v370 = vpop.permute.xlu0 %369
        %vm371 = vcmp.lt.s32.totalorder %v356, 118
        %v372 = vsel %vm371, %v368, %v370
        %373 = vst [vmem:[#allocation2 + $0x18] sm:$0xff] %v372
        %374 = vrot.lane.b32.xlu0 %v348, 117
        %v375 = vpop.permute.xlu0 %374
        %376 = vrot.lane.b32.xlu0 %v349, 117
        %v377 = vpop.permute.xlu0 %376
        %vm378 = vcmp.lt.s32.totalorder %v356, 117
        %v379 = vsel %vm378, %v375, %v377
        %380 = vst [vmem:[#allocation2 + $0x20] sm:$0xff] %v379
        %381 = vrot.lane.b32.xlu0 %v348, 116
        %v382 = vpop.permute.xlu0 %381
        %383 = vrot.lane.b32.xlu0 %v349, 116
        %v384 = vpop.permute.xlu0 %383
        %vm385 = vcmp.lt.s32.totalorder %v356, 116
        %v386 = vsel %vm385, %v382, %v384
        %387 = vst [vmem:[#allocation2 + $0x28] sm:$0xff] %v386
        %388 = vrot.lane.b32.xlu0 %v348, 108
        %v389 = vpop.permute.xlu0 %388
        %390 = vrot.lane.b32.xlu0 %v349, 108
        %v391 = vpop.permute.xlu0 %390
        %vm392 = vcmp.lt.s32.totalorder %v356, 108
        %v393 = vsel %vm392, %v389, %v391
        %394 = vst [vmem:[#allocation2 + $0x30] sm:$0xff] %v393
        %395 = vrot.lane.b32.xlu0 %v348, 107
        %v396 = vpop.permute.xlu0 %395
        %397 = vrot.lane.b32.xlu0 %v349, 107
        %v398 = vpop.permute.xlu0 %397
        %vm399 = vcmp.lt.s32.totalorder %v356, 107
        %v400 = vsel %vm399, %v396, %v398
        %401 = vst [vmem:[#allocation2 + $0x38] sm:$0xff] %v400
        %402 = vrot.lane.b32.xlu0 %v348, 106
        %v403 = vpop.permute.xlu0 %402
        %404 = vrot.lane.b32.xlu0 %v349, 106
        %v405 = vpop.permute.xlu0 %404
        %vm406 = vcmp.lt.s32.totalorder %v356, 106
        %v407 = vsel %vm406, %v403, %v405
        %408 = vst [vmem:[#allocation2 + $0x40] sm:$0xff] %v407
        %v409 = vld [vmem:[%s300] sm:$0xff]
        %v410 = vld [vmem:[%s300 + $0x8] sm:$0xff]
        %411 = vst [vmem:[#allocation2 + $0x48] sm:$0xff] %v409
        %412 = vrot.lane.b32.xlu0 %v409, 127
        %v413 = vpop.permute.xlu0 %412
        %414 = vrot.lane.b32.xlu0 %v410, 127
        %v415 = vpop.permute.xlu0 %414
        %v416 = vsel %vm357, %v413, %v415
        %417 = vst [vmem:[#allocation2 + $0x50] sm:$0xff] %v416
        %418 = vrot.lane.b32.xlu0 %v409, 126
        %v419 = vpop.permute.xlu0 %418
        %420 = vrot.lane.b32.xlu0 %v410, 126
        %v421 = vpop.permute.xlu0 %420
        %v422 = vsel %vm364, %v419, %v421
        %423 = vst [vmem:[#allocation2 + $0x58] sm:$0xff] %v422
        %424 = vrot.lane.b32.xlu0 %v409, 118
        %v425 = vpop.permute.xlu0 %424
        %426 = vrot.lane.b32.xlu0 %v410, 118
        %v427 = vpop.permute.xlu0 %426
        %v428 = vsel %vm371, %v425, %v427
        %429 = vst [vmem:[#allocation2 + $0x60] sm:$0xff] %v428
        %430 = vrot.lane.b32.xlu0 %v409, 117
        %v431 = vpop.permute.xlu0 %430
        %432 = vrot.lane.b32.xlu0 %v410, 117
        %v433 = vpop.permute.xlu0 %432
        %v434 = vsel %vm378, %v431, %v433
        %435 = vst [vmem:[#allocation2 + $0x68] sm:$0xff] %v434
        %436 = vrot.lane.b32.xlu0 %v409, 116
        %v437 = vpop.permute.xlu0 %436
        %438 = vrot.lane.b32.xlu0 %v410, 116
        %v439 = vpop.permute.xlu0 %438
        %v440 = vsel %vm385, %v437, %v439
        %441 = vst [vmem:[#allocation2 + $0x70] sm:$0xff] %v440
        %442 = vrot.lane.b32.xlu0 %v409, 108
        %v443 = vpop.permute.xlu0 %442
        %444 = vrot.lane.b32.xlu0 %v410, 108
        %v445 = vpop.permute.xlu0 %444
        %v446 = vsel %vm392, %v443, %v445
        %447 = vst [vmem:[#allocation2 + $0x78] sm:$0xff] %v446
        %448 = vrot.lane.b32.xlu0 %v409, 107
        %v449 = vpop.permute.xlu0 %448
        %450 = vrot.lane.b32.xlu0 %v410, 107
        %v451 = vpop.permute.xlu0 %450
        %v452 = vsel %vm399, %v449, %v451
        %453 = vst [vmem:[#allocation2 + $0x80] sm:$0xff] %v452
        %454 = vrot.lane.b32.xlu0 %v409, 106
        %v455 = vpop.permute.xlu0 %454
        %456 = vrot.lane.b32.xlu0 %v410, 106
        %v457 = vpop.permute.xlu0 %456
        %v458 = vsel %vm406, %v455, %v457
        %459 = vst [vmem:[#allocation2 + $0x88] sm:$0xff] %v458
        %v460 = vld [vmem:[%s309] sm:$0xff]
        %v461 = vld [vmem:[%s309 + $0x8] sm:$0xff]
        %462 = vst [vmem:[#allocation2 + $0x90] sm:$0xff] %v460
        %463 = vrot.lane.b32.xlu0 %v460, 127
        %v464 = vpop.permute.xlu0 %463
        %465 = vrot.lane.b32.xlu0 %v461, 127
        %v466 = vpop.permute.xlu0 %465
        %v467 = vsel %vm357, %v464, %v466
        %468 = vst [vmem:[#allocation2 + $0x98] sm:$0xff] %v467
        %469 = vrot.lane.b32.xlu0 %v460, 126
        %v470 = vpop.permute.xlu0 %469
        %471 = vrot.lane.b32.xlu0 %v461, 126
        %v472 = vpop.permute.xlu0 %471
        %v473 = vsel %vm364, %v470, %v472
        %474 = vst [vmem:[#allocation2 + $0xa0] sm:$0xff] %v473
        %475 = vrot.lane.b32.xlu0 %v460, 118
        %v476 = vpop.permute.xlu0 %475
        %477 = vrot.lane.b32.xlu0 %v461, 118
        %v478 = vpop.permute.xlu0 %477
        %v479 = vsel %vm371, %v476, %v478
        %480 = vst [vmem:[#allocation2 + $0xa8] sm:$0xff] %v479
        %481 = vrot.lane.b32.xlu0 %v460, 117
        %v482 = vpop.permute.xlu0 %481
        %483 = vrot.lane.b32.xlu0 %v461, 117
        %v484 = vpop.permute.xlu0 %483
        %v485 = vsel %vm378, %v482, %v484
        %486 = vst [vmem:[#allocation2 + $0xb0] sm:$0xff] %v485
        %487 = vrot.lane.b32.xlu0 %v460, 116
        %v488 = vpop.permute.xlu0 %487
        %489 = vrot.lane.b32.xlu0 %v461, 116
        %v490 = vpop.permute.xlu0 %489
        %v491 = vsel %vm385, %v488, %v490
        %492 = vst [vmem:[#allocation2 + $0xb8] sm:$0xff] %v491
        %493 = vrot.lane.b32.xlu0 %v460, 108
        %v494 = vpop.permute.xlu0 %493
        %495 = vrot.lane.b32.xlu0 %v461, 108
        %v496 = vpop.permute.xlu0 %495
        %v497 = vsel %vm392, %v494, %v496
        %498 = vst [vmem:[#allocation2 + $0xc0] sm:$0xff] %v497
        %499 = vrot.lane.b32.xlu0 %v460, 107
        %v500 = vpop.permute.xlu0 %499
        %501 = vrot.lane.b32.xlu0 %v461, 107
        %v502 = vpop.permute.xlu0 %501
        %v503 = vsel %vm399, %v500, %v502
        %504 = vst [vmem:[#allocation2 + $0xc8] sm:$0xff] %v503
        %505 = vrot.lane.b32.xlu0 %v460, 106
        %v506 = vpop.permute.xlu0 %505
        %507 = vrot.lane.b32.xlu0 %v461, 106
        %v508 = vpop.permute.xlu0 %507
        %v509 = vsel %vm406, %v506, %v508
        %510 = vst [vmem:[#allocation2 + $0xd0] sm:$0xff] %v509
        %v511 = vld [vmem:[%s3] sm:$0xff]
        %v512 = vld [vmem:[%s3 + $0x8] sm:$0xff]
        %v513 = vld [vmem:[#allocation2] sm:$0xff]
        %v514 = vld [vmem:[#allocation2 + $0x8] sm:$0xff]
        %v515 = vld [vmem:[#allocation2 + $0x10] sm:$0xff]
        %v516 = vld [vmem:[#allocation2 + $0x18] sm:$0xff]
        %v517 = vld [vmem:[#allocation2 + $0x20] sm:$0xff]
        %v518 = vld [vmem:[#allocation2 + $0x28] sm:$0xff]
        %v519 = vld [vmem:[#allocation2 + $0x30] sm:$0xff]
        %v520 = vld [vmem:[#allocation2 + $0x38] sm:$0xff]
        %v521 = vld [vmem:[#allocation2 + $0x40] sm:$0xff]
        %v522 = vld [vmem:[#allocation2 + $0x48] sm:$0xff]
        %v523 = vld [vmem:[#allocation2 + $0x50] sm:$0xff]
        %v524 = vld [vmem:[#allocation2 + $0x58] sm:$0xff]
        %v525 = vld [vmem:[#allocation2 + $0x60] sm:$0xff]
        %v526 = vld [vmem:[#allocation2 + $0x68] sm:$0xff]
        %v527 = vld [vmem:[#allocation2 + $0x70] sm:$0xff]
        %v528 = vld [vmem:[#allocation2 + $0x78] sm:$0xff]
        %v529 = vld [vmem:[#allocation2 + $0x80] sm:$0xff]
        %v530 = vld [vmem:[#allocation2 + $0x88] sm:$0xff]
        %v531 = vld [vmem:[#allocation2 + $0x90] sm:$0xff]
        %v532 = vld [vmem:[#allocation2 + $0x98] sm:$0xff]
        %v533 = vld [vmem:[#allocation2 + $0xa0] sm:$0xff]
        %v534 = vld [vmem:[#allocation2 + $0xa8] sm:$0xff]
        %v535 = vld [vmem:[#allocation2 + $0xb0] sm:$0xff]
        %v536 = vld [vmem:[#allocation2 + $0xb8] sm:$0xff]
        %v537 = vld [vmem:[#allocation2 + $0xc0] sm:$0xff]
        %v538 = vld [vmem:[#allocation2 + $0xc8] sm:$0xff]
        %v539 = vld [vmem:[#allocation2 + $0xd0] sm:$0xff]
        %v540 = vld [vmem:[%s4] sm:$0xff]
        %542 = vset.pattern.permute.xlu0 0
        %543 = vperm.xlu0 %542, %v540
        %v544 = vpop.permute.xlu0 %543
        %vm546 = vcmask 719872
        %v548 = vsel %vm546, %v512, 0
        %550 = vmatprep.subr.mxu0 0.0
        %551 = vmatpush1.msra.mxu0 %v513
        %552 = vmatprep.subr.mxu0 0.0
        %553 = vmatpush1.msra.mxu0 %v514
        %554 = vmatprep.subr.mxu0 0.0
        %555 = vmatpush1.msra.mxu0 %v515
        %556 = vmatprep.subr.mxu0 0.0
        %557 = vmatpush1.msra.mxu0 %v516
        %558 = vmatprep.subr.mxu0 0.0
        %559 = vmatpush1.msra.mxu0 %v517
        %560 = vmatprep.subr.mxu0 0.0
        %561 = vmatpush1.msra.mxu0 %v518
        %562 = vmatprep.subr.mxu0 0.0
        %563 = vmatpush1.msra.mxu0 %v519
        %564 = vmatprep.subr.mxu0 0.0
        %565 = vmatpush1.msra.mxu0 %v520
        %566 = vmatprep.subr.mxu0 0.0
        %567 = vmatpush1.msra.mxu0 %v521
        %568 = vmatprep.subr.mxu0 0.0
        %569 = vmatpush1.msra.mxu0 %v522
        %570 = vmatprep.subr.mxu0 0.0
        %571 = vmatpush1.msra.mxu0 %v523
        %572 = vmatprep.subr.mxu0 0.0
        %573 = vmatpush1.msra.mxu0 %v524
        %574 = vmatprep.subr.mxu0 0.0
        %575 = vmatpush1.msra.mxu0 %v525
        %576 = vmatprep.subr.mxu0 0.0
        %577 = vmatpush1.msra.mxu0 %v526
        %578 = vmatprep.subr.mxu0 0.0
        %579 = vmatpush1.msra.mxu0 %v527
        %580 = vmatprep.subr.mxu0 0.0
        %581 = vmatpush1.msra.mxu0 %v528
        %582 = vmatprep.subr.mxu0 0.0
        %583 = vmatpush1.msra.mxu0 %v529
        %584 = vmatprep.subr.mxu0 0.0
        %585 = vmatpush1.msra.mxu0 %v530
        %586 = vmatprep.subr.mxu0 0.0
        %587 = vmatpush1.msra.mxu0 %v531
        %588 = vmatprep.subr.mxu0 0.0
        %589 = vmatpush1.msra.mxu0 %v532
        %590 = vmatprep.subr.mxu0 0.0
        %591 = vmatpush1.msra.mxu0 %v533
        %592 = vmatprep.subr.mxu0 0.0
        %593 = vmatpush1.msra.mxu0 %v534
        %594 = vmatprep.subr.mxu0 0.0
        %595 = vmatpush1.msra.mxu0 %v535
        %596 = vmatprep.subr.mxu0 0.0
        %597 = vmatpush1.msra.mxu0 %v536
        %598 = vmatprep.subr.mxu0 0.0
        %599 = vmatpush1.msra.mxu0 %v537
        %600 = vmatprep.subr.mxu0 0.0
        %601 = vmatpush1.msra.mxu0 %v538
        %602 = vmatprep.subr.mxu0 0.0
        %603 = vmatpush1.msra.mxu0 %v539
        %604 = vmatprep.subr.mxu0 0.0
        %605 = vmatpush1.msra.mxu0 0.0
        %606 = vmatprep.subr.mxu0 0.0
        %607 = vmatpush1.msra.mxu0 0.0
        %608 = vmatprep.subr.mxu0 0.0
        %609 = vmatpush1.msra.mxu0 0.0
        %610 = vmatprep.subr.mxu0 0.0
        %611 = vmatpush1.msra.mxu0 0.0
        %612 = vmatprep.subr.mxu0 0.0
        %613 = vmatpush1.msra.mxu0 0.0
        %614 = vmatprep.mubr.f32.mxu0 %v548
        %615 = vmatmul.mubr.f32.gmra.mrb[0].mxu0 %v511
        %v616 = vpop.f32.mrb[0].mxu0
        %v617 = vadd.f32 %v544, %v616
        %v618 = vpop.f32.mrb[0].mxu0
        %619 = vdwg.mxu0
        %v620 = vtanh.pop %v617
        %621 = vst [vmem:[%s345] sm:$0xff] %v620
        %s622 = sand.u32 %s177, 1
        %s623 = scalar_lea.sflag [#allocation5], %s622
        %s624 = sand.u32 %s177, 1
        %s625 = smul.addr %s624, 8
        %s626 = scalar_lea.vmem [#allocation9], %s625
        // Predicated region
        $region53: #{tpu_custom_call.1} parent=39 // pred_check
          %p627 = pneg %p187
        $region54: #{tpu_custom_call.1} parent=39 // pred_check_branch
          %629 = sbr.rel (%p627) target = $region56
        $region55: #{tpu_custom_call.1} parent=39 // pred_region
          %s631 = ssub.s32 128, 128
          %632 = vsyncadd %s623, %s631
          %s633 = smul.addr %s29, 8
          %s634 = sadd.s32 %s30, %s633
          %s635 = smul.addr %s634, 128
          %s636 = scalar_lea.hbm %s5, %s635
          %s638 = sshll.u32 %s626, 4
          %s639 = int_to_ptr.vmem [resolvable:$true] %s638
          %641 = dma.vmem_to_hbm [thread:$0]  %s639, 128, %s636, %s623
        $region56: #{tpu_custom_call.1} parent=39 // pred_fallthru
          _
      $region40: #{tpu_custom_call.1} parent=5 // pred_fallthru
        _
      %p642 = scmp.le.s32.totalorder 2, %s20
      // Predicated region
      $region57: #{tpu_custom_call.1} parent=5 // pred_check
        %p643 = pneg %p642
      $region58: #{tpu_custom_call.1} parent=5 // pred_check_branch
        %645 = sbr.rel (%p643) target = $region60
      $region59: #{tpu_custom_call.1} parent=5 // pred_region
        %s646 = ssub.s32 %s20, 2
        // Predicated region
        $region61: #{tpu_custom_call.1} parent=59 // pred_check
          %p647 = pneg %p193
        $region62: #{tpu_custom_call.1} parent=59 // pred_check_branch
          %649 = sbr.rel (%p647) target = $region64
        $region63: #{tpu_custom_call.1} parent=59 // pred_region
          %s650 = sand.u32 %s178, 1
          %s651 = scalar_lea.sflag [#allocation5], %s650
          %s652 = sand.u32 %s178, 1
          %s653 = smul.addr %s652, 8
          %s654 = scalar_lea.vmem [#allocation9], %s653
          %655 = dma.done %s651, 128
        $region64: #{tpu_custom_call.1} parent=59 // pred_fallthru
          _
      $region60: #{tpu_custom_call.1} parent=5 // pred_fallthru
        _
    $region6: #{tpu_custom_call.1} parent=1 // loop_footer
      %s24 = sadd.s32 1, %s20
    $region7: #{tpu_custom_call.1} parent=1 // loop_footer_branch
      %19 = sbr.rel target = $region3
    $region8: #{tpu_custom_call.1} parent=1 // loop_exit
      _
    %656 = vsyncpa [#allocation4], 1
    %s657 = scalar_lea.sflag [#allocation4], 1
    %658 = vsyncpa %s657, 1
    %659 = vsyncpa [#allocation7], 1
    %s660 = scalar_lea.sflag [#allocation7], 1
    %661 = vsyncpa %s660, 1
    %662 = vsyncpa [#allocation5], 1
    %s663 = scalar_lea.sflag [#allocation5], 1
    %664 = vsyncpa %s663, 1

</llo_original>
